<compile_context>
chip_gen: v7x
topology: tpu7x:2x2x1
jax: 0.10.0
libtpu: 0.0.40
codegen_flags: <defaults>
</compile_context>

<pallas_src>
import jax
import jax.numpy as jnp
from jax.experimental import pallas as pl
from jax.experimental.pallas import tpu as pltpu


_MXU_DTYPE = jnp.bfloat16            # MXU-native operand dtype on v5e/v6e/v7x
_ACTIVATIONS = {
    "tanh": jnp.tanh,                # EUP; relu (VPU) is cheaper on v5e if allowed
    "relu": jax.nn.relu,
    "sigmoid": jax.nn.sigmoid,
}


def _cdiv(a, b):
    return -(-a // b)


def _round_up(a, b):
    return _cdiv(a, b) * b


# ----------------------------------------------------------------------------
# Pallas kernel (feature-major):  out(dout, tile) = add(dout, tile) + m(xin)
# m = `num_layers` Linear layers, activation after all but the last.
# Each layer: h <- Wt @ h  (bf16 MXU operands, f32 accumulation) + b (f32).
# ----------------------------------------------------------------------------
def _make_coupling_kernel(num_layers, act_fn):
    def kernel(add_ref, xin_ref, *refs):
        out_ref = refs[-1]
        wb = refs[:-1]                         # [w0t, b0, w1t, b1, ...]
        h = xin_ref[...]                       # (din, tile) f32
        for l in range(num_layers):
            wt = wb[2 * l][...]                # (fo, fi) bf16, pre-cast
            b = wb[2 * l + 1][...]             # (fo, 1)  f32
            h = jnp.dot(wt, h.astype(_MXU_DTYPE),
                        preferred_element_type=jnp.float32) + b
            if l < num_layers - 1:
                h = act_fn(h)
        out_ref[...] = add_ref[...] + h        # lane-dense store

    return kernel


def _pick_tile(n, tile_cap, target_steps):
    """Lane-dense tile (multiple of 128); >=2 steps for large n (v7x 2 TCs)."""
    n128 = _round_up(max(n, 1), 128)
    if n128 <= 2 * 128:
        return 128
    tile = _round_up(_cdiv(n128, target_steps), 128)
    return max(128, min(tile, tile_cap, n128))


def _coupling_pallas(add_to, mlp_in, weights_t, biases, act_fn,
                     tile_cap=32768, target_steps=4):
    """add_to + m(mlp_in), feature-major, batch-gridded single Pallas kernel."""
    n, dout = add_to.shape
    din = mlp_in.shape[1]

    # Layout plumbing: present lane-dense (feat, batch) slabs to the kernel.
    add_t = add_to.T                    # (dout, n) f32
    xin_t = mlp_in.T                    # (din,  n) f32

    tile = _pick_tile(n, tile_cap, target_steps)
    grid = (_cdiv(n, tile),)            # ragged last block handled by Pallas masking

    def stream_spec(feat):
        return pl.BlockSpec((feat, tile), lambda i: (0, i))

    def const_spec(shape):
        # Whole-array block, same block index every step -> VMEM-resident weights.
        return pl.BlockSpec(shape, lambda i: (0, 0))

    in_specs = [stream_spec(dout), stream_spec(din)]
    operands = [add_t, xin_t]
    for wt, b in zip(weights_t, biases):
        in_specs += [const_spec(wt.shape), const_spec(b.shape)]
        operands += [wt, b]

    out_t = pl.pallas_call(
        _make_coupling_kernel(len(weights_t), act_fn),
        out_shape=jax.ShapeDtypeStruct((dout, n), jnp.float32),
        grid=grid,
        in_specs=in_specs,
        out_specs=pl.BlockSpec((dout, tile), lambda i: (0, i)),
        compiler_params=pltpu.CompilerParams(
            dimension_semantics=("parallel",),      # shard tiles across TCs on v7x
            vmem_limit_bytes=32 * 1024 * 1024,       # tiny blocks now; safe everywhere
        ),
    )(*operands)

    return out_t.T                       # back to (n, dout)


# ----------------------------------------------------------------------------
# Module wrapper
# ----------------------------------------------------------------------------
class AdditiveCouplingLayerPallas:
    def __init__(self, D, d, layers, width, mode, key, activation="tanh",
                 tile_cap=32768, target_steps=4, pallas_min_rows=1024):
        self.D, self.d, self.mode = D, d, mode
        self.tile_cap = tile_cap
        self.target_steps = target_steps
        self.pallas_min_rows = pallas_min_rows
        self.act_fn = _ACTIVATIONS[activation]

        din, dout = (d, D - d) if mode == "low" else (D - d, d)
        sizes = [din] + [width] * (layers - 1) + [dout]
        ks = jax.random.split(key, len(sizes) - 1)
        weights_f32, weights_t, biases = [], [], []
        for k, (fi, fo) in zip(ks, zip(sizes[:-1], sizes[1:])):
            scale = jnp.sqrt(2.0 / (fi + fo)).astype(jnp.float32)
            w = scale * jax.random.normal(k, (fi, fo), jnp.float32)
            weights_f32.append(w)
            weights_t.append(w.T.astype(_MXU_DTYPE))          # (fo, fi) bf16, cast once
            biases.append(jnp.zeros((fo, 1), jnp.float32))    # column bias, f32
        self.weights_f32 = tuple(weights_f32)
        self.weights_t = tuple(weights_t)
        self.biases = tuple(biases)

    # -- forward ------------------------------------------------------------
    def forward(self, x1x2):
        x1, x2 = x1x2
        if self.mode == "up":
            return (self._couple(x1, x2), x2)
        elif self.mode == "low":
            return (x1, self._couple(x2, x1))
        raise ValueError

    def _couple(self, add_to, mlp_in):
        n = add_to.shape[0]
        if n < self.pallas_min_rows:
            # Tiny batches: a Pallas grid step is pure dispatch overhead;
            # let XLA fuse the dots/tanh instead.
            return add_to + self._ref_m(mlp_in)
        return _coupling_pallas(add_to, mlp_in, self.weights_t, self.biases,
                                self.act_fn, self.tile_cap, self.target_steps)

    # -- pure-JAX (f32) reference of the same math ---------------------------
    def _ref_m(self, x):
        h = x
        nlayers = len(self.weights_f32)
        for l, (w, b) in enumerate(zip(self.weights_f32, self.biases)):
            h = h @ w + b.T
            if l < nlayers - 1:
                h = self.act_fn(h)
        return h

    def forward_ref(self, x1x2):
        x1, x2 = x1x2
        if self.mode == "up":
            return (x1 + self._ref_m(x2), x2)
        return (x1, x2 + self._ref_m(x1))


if __name__ == "__main__":
    key = jax.random.PRNGKey(0)
    k_param_up, k_param_low, k_a, k_b, k_c, k_d = jax.random.split(key, 6)

    # bf16 MXU operands -> loosen tolerance vs. the f32 reference.
    ATOL = RTOL = 5e-2

    # ---- Test 1: mode='up', toy batch (single tile), layers=3 --------------
    D, d, layers, width = 8, 4, 3, 32
    up = AdditiveCouplingLayerPallas(D, d, layers, width, "up", k_param_up,
                                     pallas_min_rows=1)   # force Pallas path
    x1 = jax.random.normal(k_a, (8, d), jnp.float32)
    x2 = jax.random.normal(k_b, (8, D - d), jnp.float32)
    y1, y2 = up.forward((x1, x2))
    jax.block_until_ready((y1, y2))
    r1, r2 = up.forward_ref((x1, x2))
    assert jnp.allclose(y1, r1, atol=ATOL, rtol=RTOL)
    assert jnp.allclose(y2, r2)

    # ---- Test 2: mode='up', multi-tile batch (grid of 4 tiles) -------------
    x1_big = jax.random.normal(k_c, (4096, d), jnp.float32)
    x2_big = jax.random.normal(k_d, (4096, D - d), jnp.float32)
    y1b, y2b = up.forward((x1_big, x2_big))
    jax.block_until_ready((y1b, y2b))
    r1b, r2b = up.forward_ref((x1_big, x2_big))
    assert jnp.allclose(y1b, r1b, atol=ATOL, rtol=RTOL)
    assert jnp.allclose(y2b, r2b)

    # ---- Test 3: mode='low', uneven split, layers=4, ragged batch (1500) ---
    D2, d2, layers2 = 8, 3, 4
    low = AdditiveCouplingLayerPallas(D2, d2, layers2, width, "low",
                                      k_param_low, pallas_min_rows=1)
    z1 = jax.random.normal(k_a, (1500, d2), jnp.float32)
    z2 = jax.random.normal(k_b, (1500, D2 - d2), jnp.float32)
    w1, w2 = low.forward((z1, z2))
    jax.block_until_ready((w1, w2))
    s1, s2 = low.forward_ref((z1, z2))
    assert jnp.allclose(w1, s1)
    assert jnp.allclose(w2, s2, atol=ATOL, rtol=RTOL)

    print("KERNEL_OK")
</pallas_src>

<mosaic_0001>
module attributes {stable_mosaic.version = 11 : i64} {
  func.func @kernel(%arg0: i32, %arg1: memref<4x128xf32, #tpu.memory_space<vmem>>, %arg2: memref<4x128xf32, #tpu.memory_space<vmem>>, %arg3: memref<32x4xbf16, #tpu.memory_space<vmem>>, %arg4: memref<32x1xf32, #tpu.memory_space<vmem>>, %arg5: memref<32x32xbf16, #tpu.memory_space<vmem>>, %arg6: memref<32x1xf32, #tpu.memory_space<vmem>>, %arg7: memref<4x32xbf16, #tpu.memory_space<vmem>>, %arg8: memref<4x1xf32, #tpu.memory_space<vmem>>, %arg9: memref<4x128xf32, #tpu.memory_space<vmem>>) attributes {dimension_semantics = [#tpu.dimension_semantics<parallel>], iteration_bounds = array<i64: 1>, scalar_prefetch = 0 : i64, scratch_operands = 0 : i64, tpu.core_type = #tpu.core_type<tc>, window_params = [{transform_indices = @transform_0, window_bounds = array<i64: 4, 128>}, {transform_indices = @transform_1, window_bounds = array<i64: 4, 128>}, {pipeline_mode = #tpu.pipeline_mode<synchronous>, transform_indices = @transform_2, window_bounds = array<i64: 32, 4>}, {pipeline_mode = #tpu.pipeline_mode<synchronous>, transform_indices = @transform_3, window_bounds = array<i64: 32, 1>}, {pipeline_mode = #tpu.pipeline_mode<synchronous>, transform_indices = @transform_4, window_bounds = array<i64: 32, 32>}, {pipeline_mode = #tpu.pipeline_mode<synchronous>, transform_indices = @transform_5, window_bounds = array<i64: 32, 1>}, {pipeline_mode = #tpu.pipeline_mode<synchronous>, transform_indices = @transform_6, window_bounds = array<i64: 4, 32>}, {pipeline_mode = #tpu.pipeline_mode<synchronous>, transform_indices = @transform_7, window_bounds = array<i64: 4, 1>}, {transform_indices = @transform_8, window_bounds = array<i64: 4, 128>}]} {
    %c0 = arith.constant 0 : index
    %c0_0 = arith.constant 0 : index
    %0 = vector.load %arg2[%c0, %c0_0] : memref<4x128xf32, #tpu.memory_space<vmem>>, vector<4x128xf32>
    %c0_1 = arith.constant 0 : index
    %c0_2 = arith.constant 0 : index
    %1 = vector.load %arg3[%c0_1, %c0_2] : memref<32x4xbf16, #tpu.memory_space<vmem>>, vector<32x4xbf16>
    %c0_3 = arith.constant 0 : index
    %c0_4 = arith.constant 0 : index
    %2 = vector.load %arg4[%c0_3, %c0_4] : memref<32x1xf32, #tpu.memory_space<vmem>>, vector<32x1xf32>
    %3 = arith.truncf %0 : vector<4x128xf32> to vector<4x128xbf16>
    %cst = arith.constant dense<0.000000e+00> : vector<32x128xf32>
    %4 = tpu.matmul %1, %3, %cst {dimension_numbers = #tpu.dot_dimension_numbers<[1], [0], [0], [1], [0, 0, 1, 1], [], []>} : vector<32x4xbf16>, vector<4x128xbf16>, vector<32x128xf32> -> vector<32x128xf32>
    %5 = vector.broadcast %2 : vector<32x1xf32> to vector<32x128xf32>
    %6 = arith.addf %4, %5 : vector<32x128xf32>
    %7 = math.tanh %6 : vector<32x128xf32>
    %c0_5 = arith.constant 0 : index
    %c0_6 = arith.constant 0 : index
    %8 = vector.load %arg5[%c0_5, %c0_6] : memref<32x32xbf16, #tpu.memory_space<vmem>>, vector<32x32xbf16>
    %c0_7 = arith.constant 0 : index
    %c0_8 = arith.constant 0 : index
    %9 = vector.load %arg6[%c0_7, %c0_8] : memref<32x1xf32, #tpu.memory_space<vmem>>, vector<32x1xf32>
    %10 = arith.truncf %7 : vector<32x128xf32> to vector<32x128xbf16>
    %cst_9 = arith.constant dense<0.000000e+00> : vector<32x128xf32>
    %11 = tpu.matmul %8, %10, %cst_9 {dimension_numbers = #tpu.dot_dimension_numbers<[1], [0], [0], [1], [0, 0, 1, 1], [], []>} : vector<32x32xbf16>, vector<32x128xbf16>, vector<32x128xf32> -> vector<32x128xf32>
    %12 = vector.broadcast %9 : vector<32x1xf32> to vector<32x128xf32>
    %13 = arith.addf %11, %12 : vector<32x128xf32>
    %14 = math.tanh %13 : vector<32x128xf32>
    %c0_10 = arith.constant 0 : index
    %c0_11 = arith.constant 0 : index
    %15 = vector.load %arg7[%c0_10, %c0_11] : memref<4x32xbf16, #tpu.memory_space<vmem>>, vector<4x32xbf16>
    %c0_12 = arith.constant 0 : index
    %c0_13 = arith.constant 0 : index
    %16 = vector.load %arg8[%c0_12, %c0_13] : memref<4x1xf32, #tpu.memory_space<vmem>>, vector<4x1xf32>
    %17 = arith.truncf %14 : vector<32x128xf32> to vector<32x128xbf16>
    %cst_14 = arith.constant dense<0.000000e+00> : vector<4x128xf32>
    %18 = tpu.matmul %15, %17, %cst_14 {dimension_numbers = #tpu.dot_dimension_numbers<[1], [0], [0], [1], [0, 0, 1, 1], [], []>} : vector<4x32xbf16>, vector<32x128xbf16>, vector<4x128xf32> -> vector<4x128xf32>
    %19 = vector.broadcast %16 : vector<4x1xf32> to vector<4x128xf32>
    %20 = arith.addf %18, %19 : vector<4x128xf32>
    %c0_15 = arith.constant 0 : index
    %c0_16 = arith.constant 0 : index
    %21 = vector.load %arg1[%c0_15, %c0_16] : memref<4x128xf32, #tpu.memory_space<vmem>>, vector<4x128xf32>
    %22 = arith.addf %21, %20 : vector<4x128xf32>
    %c0_17 = arith.constant 0 : index
    %c0_18 = arith.constant 0 : index
    %23 = vector.load %arg9[%c0_17, %c0_18] : memref<4x128xf32, #tpu.memory_space<vmem>>, vector<4x128xf32>
    tpu.vector_store %arg9[%c0_17, %c0_18], %22 {strides = array<i32>} : memref<4x128xf32, #tpu.memory_space<vmem>>, vector<4x128xf32>,
    return
  }
  func.func @transform_0(%arg0: i32) -> (i32, i32) {
    %c0_i32 = arith.constant 0 : i32
    %c0_i32_0 = arith.constant 0 : i32
    return %c0_i32, %arg0 : i32, i32
  }
  func.func @transform_1(%arg0: i32) -> (i32, i32) {
    %c0_i32 = arith.constant 0 : i32
    %c0_i32_0 = arith.constant 0 : i32
    return %c0_i32, %arg0 : i32, i32
  }
  func.func @transform_2(%arg0: i32) -> (i32, i32) {
    %c0_i32 = arith.constant 0 : i32
    %c0_i32_0 = arith.constant 0 : i32
    %c0_i32_1 = arith.constant 0 : i32
    return %c0_i32, %c0_i32_0 : i32, i32
  }
  func.func @transform_3(%arg0: i32) -> (i32, i32) {
    %c0_i32 = arith.constant 0 : i32
    %c0_i32_0 = arith.constant 0 : i32
    %c0_i32_1 = arith.constant 0 : i32
    return %c0_i32, %c0_i32_0 : i32, i32
  }
  func.func @transform_4(%arg0: i32) -> (i32, i32) {
    %c0_i32 = arith.constant 0 : i32
    %c0_i32_0 = arith.constant 0 : i32
    %c0_i32_1 = arith.constant 0 : i32
    return %c0_i32, %c0_i32_0 : i32, i32
  }
  func.func @transform_5(%arg0: i32) -> (i32, i32) {
    %c0_i32 = arith.constant 0 : i32
    %c0_i32_0 = arith.constant 0 : i32
    %c0_i32_1 = arith.constant 0 : i32
    return %c0_i32, %c0_i32_0 : i32, i32
  }
  func.func @transform_6(%arg0: i32) -> (i32, i32) {
    %c0_i32 = arith.constant 0 : i32
    %c0_i32_0 = arith.constant 0 : i32
    %c0_i32_1 = arith.constant 0 : i32
    return %c0_i32, %c0_i32_0 : i32, i32
  }
  func.func @transform_7(%arg0: i32) -> (i32, i32) {
    %c0_i32 = arith.constant 0 : i32
    %c0_i32_0 = arith.constant 0 : i32
    %c0_i32_1 = arith.constant 0 : i32
    return %c0_i32, %c0_i32_0 : i32, i32
  }
  func.func @transform_8(%arg0: i32) -> (i32, i32) {
    %c0_i32 = arith.constant 0 : i32
    %c0_i32_0 = arith.constant 0 : i32
    return %c0_i32, %arg0 : i32, i32
  }
}

</mosaic_0001>

<llo_original>
// kernel: tpu_custom_call.1
$region0: #{tpu_custom_call.1}
  #allocation0 [shape = 'u32[]', space=smem, size = 0x4, offset = 0x4, fixed_abs, tag = 'smem constant byte address 0x4 - core index']
  #allocation1 [shape = 'u32[144,128]{1,0:T(1,128)}', space=vmem, size = 0x12000, scoped, tag = 'internal scratch']
  %s0 = inlined_call_operand.vmem [shape: f32[4,8], index: 0, kind: input, shape index: {}]
  %s1 = inlined_call_operand.vmem [shape: f32[4,8], index: 1, kind: input, shape index: {}]
  %s2 = inlined_call_operand.vmem [shape: bf16[32,4], index: 2, kind: input, shape index: {}]
  %s3 = inlined_call_operand.vmem [shape: f32[32,1], index: 3, kind: input, shape index: {}]
  %s4 = inlined_call_operand.vmem [shape: bf16[32,32], index: 4, kind: input, shape index: {}]
  %s5 = inlined_call_operand.vmem [shape: f32[32,1], index: 5, kind: input, shape index: {}]
  %s6 = inlined_call_operand.vmem [shape: bf16[4,32], index: 6, kind: input, shape index: {}]
  %s7 = inlined_call_operand.vmem [shape: f32[4,1], index: 7, kind: input, shape index: {}]
  %s8 = inlined_call_operand.hbm [shape: f32[4,8], index: 8, kind: output, shape index: {}]
  %s9 = sld [smem:[#allocation0]]
  $region42: #{tpu_custom_call.1} parent=0
    _
  %s11 = ssub.s32 1, %s9
  %s12 = scalar_select 0, %s11, %s9
  $region1: #{tpu_custom_call.1} parent=0
    #allocation2 [shape = 'u8[2048]{0}', space=vmem, size = 0x800, scoped, tag = 'output window, operand 0, single buffered']
    #allocation3 [shape = 's32[1]{0}', space=sflag, size = 0x4, scoped, tag = 'scoped memory for tpu_custom_call.1']
    %13 = vsyncpa [#allocation3], 0
    // Predicated region
    $region2: #{tpu_custom_call.1} parent=1 // pred_check
      _
    $region3: #{tpu_custom_call.1} parent=1 // pred_check_branch
      %15 = sbr.rel (0) target = $region5
    $region4: #{tpu_custom_call.1} parent=1 // pred_region
      _
    $region5: #{tpu_custom_call.1} parent=1 // pred_fallthru
      _
    // Predicated region
    $region6: #{tpu_custom_call.1} parent=1 // pred_check
      _
    $region7: #{tpu_custom_call.1} parent=1 // pred_check_branch
      %17 = sbr.rel (0) target = $region9
    $region8: #{tpu_custom_call.1} parent=1 // pred_region
      _
    $region9: #{tpu_custom_call.1} parent=1 // pred_fallthru
      _
    // Predicated region
    $region10: #{tpu_custom_call.1} parent=1 // pred_check
      _
    $region11: #{tpu_custom_call.1} parent=1 // pred_check_branch
      %19 = sbr.rel (0) target = $region13
    $region12: #{tpu_custom_call.1} parent=1 // pred_region
      _
    $region13: #{tpu_custom_call.1} parent=1 // pred_fallthru
      _
    // Predicated region
    $region14: #{tpu_custom_call.1} parent=1 // pred_check
      _
    $region15: #{tpu_custom_call.1} parent=1 // pred_check_branch
      %21 = sbr.rel (0) target = $region17
    $region16: #{tpu_custom_call.1} parent=1 // pred_region
      _
    $region17: #{tpu_custom_call.1} parent=1 // pred_fallthru
      _
    // Predicated region
    $region18: #{tpu_custom_call.1} parent=1 // pred_check
      _
    $region19: #{tpu_custom_call.1} parent=1 // pred_check_branch
      %23 = sbr.rel (0) target = $region21
    $region20: #{tpu_custom_call.1} parent=1 // pred_region
      _
    $region21: #{tpu_custom_call.1} parent=1 // pred_fallthru
      _
    // Predicated region
    $region22: #{tpu_custom_call.1} parent=1 // pred_check
      _
    $region23: #{tpu_custom_call.1} parent=1 // pred_check_branch
      %25 = sbr.rel (0) target = $region25
    $region24: #{tpu_custom_call.1} parent=1 // pred_region
      _
    $region25: #{tpu_custom_call.1} parent=1 // pred_fallthru
      _
    // Predicated region
    $region26: #{tpu_custom_call.1} parent=1 // pred_check
      _
    $region27: #{tpu_custom_call.1} parent=1 // pred_check_branch
      %27 = sbr.rel (0) target = $region29
    $region28: #{tpu_custom_call.1} parent=1 // pred_region
      _
    $region29: #{tpu_custom_call.1} parent=1 // pred_fallthru
      _
    // Predicated region
    $region30: #{tpu_custom_call.1} parent=1 // pred_check
      _
    $region31: #{tpu_custom_call.1} parent=1 // pred_check_branch
      %29 = sbr.rel (0) target = $region33
    $region32: #{tpu_custom_call.1} parent=1 // pred_region
      _
    $region33: #{tpu_custom_call.1} parent=1 // pred_fallthru
      _
    %v31 = vld [vmem:[%s1] sm:$0xf]
    %v32 = vld [vmem:[%s2] sm:$0xf]
    %v33 = vld [vmem:[%s2 + $0x4] sm:$0xf]
    %v34 = vld [vmem:[%s2 + $0x8] sm:$0xf]
    %v35 = vld [vmem:[%s2 + $0xc] sm:$0xf]
    %v36 = vld [vmem:[%s3] sm:$0xff]
    %v37 = vld [vmem:[%s3 + $0x8] sm:$0xff]
    %v38 = vld [vmem:[%s3 + $0x10] sm:$0xff]
    %v39 = vld [vmem:[%s3 + $0x18] sm:$0xff]
    %v40 = vpack.c.bf16 %v31, %v31
    %42 = vset.pattern.permute.xlu0 0
    %43 = vperm.xlu0 %42, %v36
    %v44 = vpop.permute.xlu0 %43
    %47 = vset.pattern.permute.xlu0 0
    %48 = vperm.xlu0 %47, %v37
    %v49 = vpop.permute.xlu0 %48
    %52 = vset.pattern.permute.xlu0 0
    %53 = vperm.xlu0 %52, %v38
    %v54 = vpop.permute.xlu0 %53
    %57 = vset.pattern.permute.xlu0 0
    %58 = vperm.xlu0 %57, %v39
    %v59 = vpop.permute.xlu0 %58
    %v65 = vunpack.c.l.b16 %v32
    %v66 = vunpack.c.l.b16 %v33
    %v67 = vunpack.c.l.b16 %v34
    %v68 = vunpack.c.l.b16 %v35
    %v69 = vpack.c.b16 %v66, %v65
    %v70 = vpack.c.b16 %v68, %v67
    %vm71 = vcmask 31744
    %v73 = vsel %vm71, %v69, 0
    %v76 = vsel %vm71, %v70, 0
    %vm78 = vcmask 1041408
    %v80 = vsel %vm78, %v40, 0
    %82 = vmatprep.subr.bf16.mxu0 0
    %83 = vmatpush1.bf16.msra.mxu0 %v80
    %84 = vmatprep.subr.bf16.mxu0 0
    %85 = vmatpush1.bf16.msra.mxu0 0
    %86 = vmatprep.subr.bf16.mxu0 0
    %87 = vmatpush1.bf16.msra.mxu0 0
    %88 = vmatprep.subr.bf16.mxu0 0
    %89 = vmatpush1.bf16.msra.mxu0 0
    %90 = vmatprep.subr.bf16.mxu0 0
    %91 = vmatpush1.bf16.msra.mxu0 0
    %92 = vmatprep.subr.bf16.mxu0 0
    %93 = vmatpush1.bf16.msra.mxu0 0
    %94 = vmatprep.subr.bf16.mxu0 0
    %95 = vmatpush1.bf16.msra.mxu0 0
    %96 = vmatprep.subr.bf16.mxu0 0
    %97 = vmatpush1.bf16.msra.mxu0 0
    %98 = vmatprep.subr.bf16.mxu0 0
    %99 = vmatpush1.bf16.msra.mxu0 0
    %100 = vmatprep.subr.bf16.mxu0 0
    %101 = vmatpush1.bf16.msra.mxu0 0
    %102 = vmatprep.subr.bf16.mxu0 0
    %103 = vmatpush1.bf16.msra.mxu0 0
    %104 = vmatprep.subr.bf16.mxu0 0
    %105 = vmatpush1.bf16.msra.mxu0 0
    %106 = vmatprep.subr.bf16.mxu0 0
    %107 = vmatpush1.bf16.msra.mxu0 0
    %108 = vmatprep.subr.bf16.mxu0 0
    %109 = vmatpush1.bf16.msra.mxu0 0
    %110 = vmatprep.subr.bf16.mxu0 0
    %111 = vmatpush1.bf16.msra.mxu0 0
    %112 = vmatprep.subr.bf16.mxu0 0
    %113 = vmatpush1.bf16.msra.mxu0 0
    %114 = vmatprep.mubr.bf16.mxu0 0
    %115 = vmatmul.mubr.bf16.gmra.mrb[0].mxu0 %v73
    %v116 = vpop.f32.mrb[0].mxu0
    %v117 = vadd.f32 %v44, %v116
    %v118 = vpop.f32.mrb[0].mxu0
    %v119 = vpop.f32.mrb[0].mxu0
    %v120 = vadd.f32 %v49, %v119
    %v121 = vpop.f32.mrb[0].mxu0
    %122 = vmatprep.mubr.bf16.mxu0 0
    %123 = vmatmul.mubr.bf16.gmra.mrb[0].mxu0 %v76
    %v124 = vpop.f32.mrb[0].mxu0
    %v125 = vadd.f32 %v54, %v124
    %v126 = vpop.f32.mrb[0].mxu0
    %v127 = vpop.f32.mrb[0].mxu0
    %v128 = vadd.f32 %v59, %v127
    %v129 = vpop.f32.mrb[0].mxu0
    %130 = vdwg.mxu0
    %v131 = vtanh.pop %v117
    %v132 = vtanh.pop %v120
    %v133 = vtanh.pop %v125
    %v134 = vtanh.pop %v128
    %v135 = vld [vmem:[%s4] sm:$0xf]
    %v136 = vld [vmem:[%s4 + $0x4] sm:$0xf]
    %v137 = vld [vmem:[%s4 + $0x8] sm:$0xf]
    %v138 = vld [vmem:[%s4 + $0xc] sm:$0xf]
    %v139 = vld [vmem:[%s5] sm:$0xff]
    %v140 = vld [vmem:[%s5 + $0x8] sm:$0xff]
    %v141 = vld [vmem:[%s5 + $0x10] sm:$0xff]
    %v142 = vld [vmem:[%s5 + $0x18] sm:$0xff]
    %v143 = vpack.c.bf16 %v132, %v131
    %v144 = vpack.c.bf16 %v134, %v133
    %146 = vset.pattern.permute.xlu0 0
    %147 = vperm.xlu0 %146, %v139
    %v148 = vpop.permute.xlu0 %147
    %151 = vset.pattern.permute.xlu0 0
    %152 = vperm.xlu0 %151, %v140
    %v153 = vpop.permute.xlu0 %152
    %156 = vset.pattern.permute.xlu0 0
    %157 = vperm.xlu0 %156, %v141
    %v158 = vpop.permute.xlu0 %157
    %161 = vset.pattern.permute.xlu0 0
    %162 = vperm.xlu0 %161, %v142
    %v163 = vpop.permute.xlu0 %162
    %v169 = vunpack.c.l.b16 %v135
    %v170 = vunpack.c.l.b16 %v136
    %v171 = vunpack.c.l.b16 %v137
    %v172 = vunpack.c.l.b16 %v138
    %v173 = vpack.c.b16 %v170, %v169
    %v174 = vpack.c.b16 %v172, %v171
    %vm175 = vcmask 261120
    %v177 = vsel %vm175, %v173, 0
    %v180 = vsel %vm175, %v174, 0
    %182 = vmatprep.subr.bf16.mxu0 0
    %183 = vmatpush1.bf16.msra.mxu0 %v143
    %184 = vmatprep.subr.bf16.mxu0 0
    %185 = vmatpush1.bf16.msra.mxu0 %v144
    %186 = vmatprep.subr.bf16.mxu0 0
    %187 = vmatpush1.bf16.msra.mxu0 0
    %188 = vmatprep.subr.bf16.mxu0 0
    %189 = vmatpush1.bf16.msra.mxu0 0
    %190 = vmatprep.subr.bf16.mxu0 0
    %191 = vmatpush1.bf16.msra.mxu0 0
    %192 = vmatprep.subr.bf16.mxu0 0
    %193 = vmatpush1.bf16.msra.mxu0 0
    %194 = vmatprep.subr.bf16.mxu0 0
    %195 = vmatpush1.bf16.msra.mxu0 0
    %196 = vmatprep.subr.bf16.mxu0 0
    %197 = vmatpush1.bf16.msra.mxu0 0
    %198 = vmatprep.subr.bf16.mxu0 0
    %199 = vmatpush1.bf16.msra.mxu0 0
    %200 = vmatprep.subr.bf16.mxu0 0
    %201 = vmatpush1.bf16.msra.mxu0 0
    %202 = vmatprep.subr.bf16.mxu0 0
    %203 = vmatpush1.bf16.msra.mxu0 0
    %204 = vmatprep.subr.bf16.mxu0 0
    %205 = vmatpush1.bf16.msra.mxu0 0
    %206 = vmatprep.subr.bf16.mxu0 0
    %207 = vmatpush1.bf16.msra.mxu0 0
    %208 = vmatprep.subr.bf16.mxu0 0
    %209 = vmatpush1.bf16.msra.mxu0 0
    %210 = vmatprep.subr.bf16.mxu0 0
    %211 = vmatpush1.bf16.msra.mxu0 0
    %212 = vmatprep.subr.bf16.mxu0 0
    %213 = vmatpush1.bf16.msra.mxu0 0
    %214 = vmatprep.mubr.bf16.mxu0 0
    %215 = vmatmul.mubr.bf16.gmra.mrb[0].mxu0 %v177
    %v216 = vpop.f32.mrb[0].mxu0
    %v217 = vadd.f32 %v148, %v216
    %v218 = vpop.f32.mrb[0].mxu0
    %v219 = vpop.f32.mrb[0].mxu0
    %v220 = vadd.f32 %v153, %v219
    %v221 = vpop.f32.mrb[0].mxu0
    %222 = vmatprep.mubr.bf16.mxu0 0
    %223 = vmatmul.mubr.bf16.gmra.mrb[0].mxu0 %v180
    %v224 = vpop.f32.mrb[0].mxu0
    %v225 = vadd.f32 %v158, %v224
    %v226 = vpop.f32.mrb[0].mxu0
    %v227 = vpop.f32.mrb[0].mxu0
    %v228 = vadd.f32 %v163, %v227
    %v229 = vpop.f32.mrb[0].mxu0
    %230 = vdwg.mxu0
    %v231 = vtanh.pop %v217
    %v232 = vtanh.pop %v220
    %v233 = vtanh.pop %v225
    %v234 = vtanh.pop %v228
    %v235 = vld [vmem:[%s6] sm:$0x3]
    %v236 = vld [vmem:[%s7] sm:$0xf]
    %v237 = vpack.c.bf16 %v232, %v231
    %v238 = vpack.c.bf16 %v234, %v233
    %240 = vset.pattern.permute.xlu0 0
    %241 = vperm.xlu0 %240, %v236
    %v242 = vpop.permute.xlu0 %241
    %v245 = vsel %vm175, %v235, 0
    %247 = vmatprep.subr.bf16.mxu0 0
    %248 = vmatpush1.bf16.msra.mxu0 %v237
    %249 = vmatprep.subr.bf16.mxu0 0
    %250 = vmatpush1.bf16.msra.mxu0 %v238
    %251 = vmatprep.subr.bf16.mxu0 0
    %252 = vmatpush1.bf16.msra.mxu0 0
    %253 = vmatprep.subr.bf16.mxu0 0
    %254 = vmatpush1.bf16.msra.mxu0 0
    %255 = vmatprep.subr.bf16.mxu0 0
    %256 = vmatpush1.bf16.msra.mxu0 0
    %257 = vmatprep.subr.bf16.mxu0 0
    %258 = vmatpush1.bf16.msra.mxu0 0
    %259 = vmatprep.subr.bf16.mxu0 0
    %260 = vmatpush1.bf16.msra.mxu0 0
    %261 = vmatprep.subr.bf16.mxu0 0
    %262 = vmatpush1.bf16.msra.mxu0 0
    %263 = vmatprep.subr.bf16.mxu0 0
    %264 = vmatpush1.bf16.msra.mxu0 0
    %265 = vmatprep.subr.bf16.mxu0 0
    %266 = vmatpush1.bf16.msra.mxu0 0
    %267 = vmatprep.subr.bf16.mxu0 0
    %268 = vmatpush1.bf16.msra.mxu0 0
    %269 = vmatprep.subr.bf16.mxu0 0
    %270 = vmatpush1.bf16.msra.mxu0 0
    %271 = vmatprep.subr.bf16.mxu0 0
    %272 = vmatpush1.bf16.msra.mxu0 0
    %273 = vmatprep.subr.bf16.mxu0 0
    %274 = vmatpush1.bf16.msra.mxu0 0
    %275 = vmatprep.subr.bf16.mxu0 0
    %276 = vmatpush1.bf16.msra.mxu0 0
    %277 = vmatprep.subr.bf16.mxu0 0
    %278 = vmatpush1.bf16.msra.mxu0 0
    %279 = vmatprep.mubr.bf16.mxu0 0
    %280 = vmatmul.mubr.bf16.gmra.mrb[0].mxu0 %v245
    %v281 = vpop.f32.mrb[0].mxu0
    %v282 = vadd.f32 %v242, %v281
    %v283 = vpop.f32.mrb[0].mxu0
    %v284 = vpop.f32.mrb[0].mxu0
    %v285 = vpop.f32.mrb[0].mxu0
    %286 = vdwg.mxu0
    %v287 = vld [vmem:[%s0] sm:$0xf]
    %v288 = vadd.f32 %v287, %v282
    %289 = vst [vmem:[#allocation2] sm:$0xf] %v288
    // Predicated region
    $region34: #{tpu_custom_call.1} parent=1 // pred_check
      _
    $region35: #{tpu_custom_call.1} parent=1 // pred_check_branch
      %291 = sbr.rel (0) target = $region37
    $region36: #{tpu_custom_call.1} parent=1 // pred_region
      %s293 = ssub.s32 64, 64
      %294 = vsyncadd [#allocation3], %s293
      %s296 = sshll.u32 [#allocation2], 4
      %s297 = int_to_ptr.vmem [resolvable:$true] %s296
      %299 = dma.vmem_to_hbm [thread:$0]  %s297, 64, %s8, [#allocation3]
    $region37: #{tpu_custom_call.1} parent=1 // pred_fallthru
      _
    // Predicated region
    $region38: #{tpu_custom_call.1} parent=1 // pred_check
      _
    $region39: #{tpu_custom_call.1} parent=1 // pred_check_branch
      %301 = sbr.rel (0) target = $region41
    $region40: #{tpu_custom_call.1} parent=1 // pred_region
      %302 = dma.done [#allocation3], 64
    $region41: #{tpu_custom_call.1} parent=1 // pred_fallthru
      _
    %303 = vsyncpa [#allocation3], 1

</llo_original>
